<compile_context>
chip_gen: v6e
topology: v6e:2x2x1
jax: 0.10.0
libtpu: 0.0.40
codegen_flags: <defaults>
</compile_context>

<pallas_src>
import math

import jax
import jax.numpy as jnp
import numpy as np
from jax.experimental import pallas as pl
from jax.experimental.pallas import tpu as pltpu


def _round_up(x, m):
    return ((x + m - 1) // m) * m


# ------------------------------ fused forward kernel ------------------------------
def _fused_kernel(x_ref, few_ref, feb_ref, wih_ref, whh_ref, b_ref,
                  h0_ref, c0_ref, hw_ref, hb_ref,
                  out_ref, hT_ref, cT_ref):
    Fp = h0_ref.shape[-1]

    # feature extractor: (Np, Kp) @ (Kp, Fp) + b, ReLU  -- stays in vregs
    feats = jnp.maximum(
        jnp.dot(x_ref[...], few_ref[...], preferred_element_type=jnp.float32)
        + feb_ref[...], 0.0)

    # LSTM cell, PyTorch gate order i, f, g, o.  gates is (Np, 4*Fp); with
    # Fp = 128 every gate slice is a lane-tile-aligned free view.
    gates = (jnp.dot(feats, wih_ref[...], preferred_element_type=jnp.float32)
             + jnp.dot(h0_ref[...], whh_ref[...], preferred_element_type=jnp.float32)
             + b_ref[...])
    i_g = jax.nn.sigmoid(gates[:, 0 * Fp:1 * Fp])
    f_g = jax.nn.sigmoid(gates[:, 1 * Fp:2 * Fp])
    g_g = jnp.tanh(gates[:, 2 * Fp:3 * Fp])
    o_g = jax.nn.sigmoid(gates[:, 3 * Fp:4 * Fp])

    c_new = f_g * c0_ref[...] + i_g * g_g          # padded lanes stay exactly 0
    h_new = o_g * jnp.tanh(c_new)
    hT_ref[...] = h_new
    cT_ref[...] = c_new

    # fused actor+critic head: single (Fp, 128) matmul, 128-lane dense store
    out_ref[...] = (jnp.dot(h_new, hw_ref[...], preferred_element_type=jnp.float32)
                    + hb_ref[...])


def fused_forward(x, few, feb, wih, whh, b, h0, c0, hw, hb):
    Np = x.shape[0]
    Fp = h0.shape[-1]
    Hp = hw.shape[-1]
    vmem = lambda: pl.BlockSpec(memory_space=pltpu.MemorySpace.VMEM)
    return pl.pallas_call(
        _fused_kernel,
        out_shape=(jax.ShapeDtypeStruct((Np, Hp), jnp.float32),
                   jax.ShapeDtypeStruct((Np, Fp), jnp.float32),
                   jax.ShapeDtypeStruct((Np, Fp), jnp.float32)),
        in_specs=[vmem() for _ in range(10)],
        out_specs=(vmem(), vmem(), vmem()),
    )(x, few, feb, wih, whh, b, h0, c0, hw, hb)


# ------------------------------ param init & packing ------------------------------
def _uniform(key, shape, bound):
    return jax.random.uniform(key, shape, jnp.float32, -bound, bound)


def init_params(key, in_dim, F, A):
    ks = jax.random.split(key, 10)
    b_fe = 1.0 / math.sqrt(in_dim)
    b_h = 1.0 / math.sqrt(F)
    return {
        "fe_w": _uniform(ks[0], (in_dim, F), b_fe),   # transposed vs nn.Linear
        "fe_b": _uniform(ks[1], (F,), b_fe),
        "w_ih": _uniform(ks[2], (F, 4 * F), b_h),     # transposed vs nn.LSTM
        "w_hh": _uniform(ks[3], (F, 4 * F), b_h),
        "b_ih": _uniform(ks[4], (4 * F,), b_h),
        "b_hh": _uniform(ks[5], (4 * F,), b_h),
        "actor_w": _uniform(ks[6], (F, A), b_h),
        "actor_b": _uniform(ks[7], (A,), b_h),
        "critic_w": _uniform(ks[8], (F, 1), b_h),
        "critic_b": _uniform(ks[9], (1,), b_h),
    }


def pack_params(p, in_dim, F, A):
    """One-time repack into lane-aligned, zero-padded f32 blocks."""
    Kp = _round_up(in_dim, 128)
    Fp = _round_up(F, 128)
    Hp = _round_up(A + 1, 128)

    few = jnp.zeros((Kp, Fp), jnp.float32).at[:in_dim, :F].set(p["fe_w"])
    feb = jnp.zeros((1, Fp), jnp.float32).at[0, :F].set(p["fe_b"])

    def pack_gates(w):  # (F, 4F) -> (Fp, 4Fp); gate k occupies cols [k*Fp, k*Fp+F)
        out = jnp.zeros((Fp, 4 * Fp), jnp.float32)
        for k in range(4):
            out = out.at[:F, k * Fp:k * Fp + F].set(w[:, k * F:(k + 1) * F])
        return out

    wih = pack_gates(p["w_ih"])
    whh = pack_gates(p["w_hh"])

    bsum = p["b_ih"] + p["b_hh"]
    bias = jnp.zeros((1, 4 * Fp), jnp.float32)
    for k in range(4):
        bias = bias.at[0, k * Fp:k * Fp + F].set(bsum[k * F:(k + 1) * F])

    hw = (jnp.zeros((Fp, Hp), jnp.float32)
          .at[:F, :A].set(p["actor_w"])
          .at[:F, A:A + 1].set(p["critic_w"]))
    hb = (jnp.zeros((1, Hp), jnp.float32)
          .at[0, :A].set(p["actor_b"])
          .at[0, A].set(p["critic_b"][0]))

    return dict(few=few, feb=feb, wih=wih, whh=whh, b=bias, hw=hw, hb=hb,
                K=in_dim, Kp=Kp, F=F, Fp=Fp, A=A, Hp=Hp)


# ------------------------------ full forward (wrapper glue) ------------------------------
def custom_lstm_forward(obs, h_in, c_in, pk):
    N = obs.shape[0]
    K, Kp, F, Fp, A = pk["K"], pk["Kp"], pk["F"], pk["Fp"], pk["A"]
    Np = _round_up(max(N, 8), 8)            # pad batch to a full sublane tile

    x = obs.reshape(N, -1)                  # NCHW flatten, (N, C*H*W)
    x = jnp.zeros((Np, Kp), jnp.float32).at[:N, :K].set(x)
    h0 = jnp.zeros((Np, Fp), jnp.float32).at[:N, :F].set(h_in[0])
    c0 = jnp.zeros((Np, Fp), jnp.float32).at[:N, :F].set(c_in[0])

    out, hT, cT = fused_forward(x, pk["few"], pk["feb"], pk["wih"], pk["whh"],
                                pk["b"], h0, c0, pk["hw"], pk["hb"])

    # features.view((-1,) + features.shape[-3:]) on 2-D features => seq length 1
    logits = out[:N, :A].reshape(1, N, A)
    values = out[:N, A:A + 1].reshape(1, N, 1)
    h_out = hT[:N, :F][None]
    c_out = cT[:N, :F][None]
    return logits, values, (h_out, c_out)


# ------------------------------ pure-JAX reference ------------------------------
def reference_forward(obs, h_in, c_in, p):
    N = obs.shape[0]
    F = p["fe_w"].shape[1]
    feats = jax.nn.relu(obs.reshape(N, -1) @ p["fe_w"] + p["fe_b"])
    seq = feats.reshape((-1, N, F))
    h, c = h_in[0], c_in[0]
    bias = p["b_ih"] + p["b_hh"]
    ys = []
    for t in range(seq.shape[0]):
        g = seq[t] @ p["w_ih"] + h @ p["w_hh"] + bias
        i = jax.nn.sigmoid(g[:, :F])
        f = jax.nn.sigmoid(g[:, F:2 * F])
        gg = jnp.tanh(g[:, 2 * F:3 * F])
        o = jax.nn.sigmoid(g[:, 3 * F:])
        c = f * c + i * gg
        h = o * jnp.tanh(c)
        ys.append(h)
    y = jnp.stack(ys)
    logits = y @ p["actor_w"] + p["actor_b"]
    values = y @ p["critic_w"] + p["critic_b"]
    return logits, values, (h[None], c[None])


if __name__ == "__main__":
    B, C, H, W = 2, 4, 16, 16
    FEATURES_DIM = 64
    N_ACTIONS = 6

    key = jax.random.PRNGKey(0)
    k_obs, k_par = jax.random.split(key)
    obs = jax.random.normal(k_obs, (B, C, H, W), jnp.float32)
    params = init_params(k_par, C * H * W, FEATURES_DIM, N_ACTIONS)
    packed = pack_params(params, C * H * W, FEATURES_DIM, N_ACTIONS)
    h_in = jnp.zeros((1, B, FEATURES_DIM), jnp.float32)
    c_in = jnp.zeros((1, B, FEATURES_DIM), jnp.float32)

    fwd = jax.jit(lambda o, h, c: custom_lstm_forward(o, h, c, packed))
    logits, values, (h_out, c_out) = fwd(obs, h_in, c_in)
    jax.block_until_ready((logits, values, h_out, c_out))

    # sanity check against a pure-JAX reference
    r_logits, r_values, (r_h, r_c) = reference_forward(obs, h_in, c_in, params)
    np.testing.assert_allclose(np.asarray(logits), np.asarray(r_logits), rtol=2e-3, atol=2e-3)
    np.testing.assert_allclose(np.asarray(values), np.asarray(r_values), rtol=2e-3, atol=2e-3)
    np.testing.assert_allclose(np.asarray(h_out), np.asarray(r_h), rtol=2e-3, atol=2e-3)
    np.testing.assert_allclose(np.asarray(c_out), np.asarray(r_c), rtol=2e-3, atol=2e-3)

    print("KERNEL_OK")
</pallas_src>

<mosaic_0001>
module attributes {stable_mosaic.version = 11 : i64} {
  func.func @_fused_kernel(%arg0: memref<8x1024xf32, #tpu.memory_space<vmem>>, %arg1: memref<1024x128xf32, #tpu.memory_space<vmem>>, %arg2: memref<1x128xf32, #tpu.memory_space<vmem>>, %arg3: memref<128x512xf32, #tpu.memory_space<vmem>>, %arg4: memref<128x512xf32, #tpu.memory_space<vmem>>, %arg5: memref<1x512xf32, #tpu.memory_space<vmem>>, %arg6: memref<8x128xf32, #tpu.memory_space<vmem>>, %arg7: memref<8x128xf32, #tpu.memory_space<vmem>>, %arg8: memref<128x128xf32, #tpu.memory_space<vmem>>, %arg9: memref<1x128xf32, #tpu.memory_space<vmem>>, %arg10: memref<8x128xf32, #tpu.memory_space<vmem>>, %arg11: memref<8x128xf32, #tpu.memory_space<vmem>>, %arg12: memref<8x128xf32, #tpu.memory_space<vmem>>) attributes {dimension_semantics = [], scalar_prefetch = 0 : i64, scratch_operands = 0 : i64, tpu.core_type = #tpu.core_type<tc>} {
    %c0 = arith.constant 0 : index
    %c0_0 = arith.constant 0 : index
    %0 = vector.load %arg0[%c0, %c0_0] : memref<8x1024xf32, #tpu.memory_space<vmem>>, vector<8x1024xf32>
    %c0_1 = arith.constant 0 : index
    %c0_2 = arith.constant 0 : index
    %1 = vector.load %arg1[%c0_1, %c0_2] : memref<1024x128xf32, #tpu.memory_space<vmem>>, vector<1024x128xf32>
    %cst = arith.constant dense<0.000000e+00> : vector<8x128xf32>
    %2 = tpu.matmul %0, %1, %cst {dimension_numbers = #tpu.dot_dimension_numbers<[1], [0], [0], [1], [0, 0, 1, 1], [], []>} : vector<8x1024xf32>, vector<1024x128xf32>, vector<8x128xf32> -> vector<8x128xf32>
    %c0_3 = arith.constant 0 : index
    %c0_4 = arith.constant 0 : index
    %3 = vector.load %arg2[%c0_3, %c0_4] : memref<1x128xf32, #tpu.memory_space<vmem>>, vector<1x128xf32>
    %4 = vector.broadcast %3 : vector<1x128xf32> to vector<8x128xf32>
    %5 = arith.addf %2, %4 : vector<8x128xf32>
    %cst_5 = arith.constant 0.000000e+00 : f32
    %6 = vector.broadcast %cst_5 : f32 to vector<8x128xf32>
    %7 = arith.maximumf %5, %6 : vector<8x128xf32>
    %c0_6 = arith.constant 0 : index
    %c0_7 = arith.constant 0 : index
    %8 = vector.load %arg3[%c0_6, %c0_7] : memref<128x512xf32, #tpu.memory_space<vmem>>, vector<128x512xf32>
    %cst_8 = arith.constant dense<0.000000e+00> : vector<8x512xf32>
    %9 = tpu.matmul %7, %8, %cst_8 {dimension_numbers = #tpu.dot_dimension_numbers<[1], [0], [0], [1], [0, 0, 1, 1], [], []>} : vector<8x128xf32>, vector<128x512xf32>, vector<8x512xf32> -> vector<8x512xf32>
    %c0_9 = arith.constant 0 : index
    %c0_10 = arith.constant 0 : index
    %10 = vector.load %arg6[%c0_9, %c0_10] : memref<8x128xf32, #tpu.memory_space<vmem>>, vector<8x128xf32>
    %c0_11 = arith.constant 0 : index
    %c0_12 = arith.constant 0 : index
    %11 = vector.load %arg4[%c0_11, %c0_12] : memref<128x512xf32, #tpu.memory_space<vmem>>, vector<128x512xf32>
    %cst_13 = arith.constant dense<0.000000e+00> : vector<8x512xf32>
    %12 = tpu.matmul %10, %11, %cst_13 {dimension_numbers = #tpu.dot_dimension_numbers<[1], [0], [0], [1], [0, 0, 1, 1], [], []>} : vector<8x128xf32>, vector<128x512xf32>, vector<8x512xf32> -> vector<8x512xf32>
    %13 = arith.addf %9, %12 : vector<8x512xf32>
    %c0_14 = arith.constant 0 : index
    %c0_15 = arith.constant 0 : index
    %14 = vector.load %arg5[%c0_14, %c0_15] : memref<1x512xf32, #tpu.memory_space<vmem>>, vector<1x512xf32>
    %15 = vector.broadcast %14 : vector<1x512xf32> to vector<8x512xf32>
    %16 = arith.addf %13, %15 : vector<8x512xf32>
    %17 = vector.extract_strided_slice %16 {offsets = [0, 0], sizes = [8, 128], strides = [1, 1]} : vector<8x512xf32> to vector<8x128xf32>
    %18 = arith.negf %17 : vector<8x128xf32>
    %19 = math.exp %18 : vector<8x128xf32>
    %cst_16 = arith.constant 1.000000e+00 : f32
    %20 = vector.broadcast %cst_16 : f32 to vector<8x128xf32>
    %21 = arith.addf %20, %19 : vector<8x128xf32>
    %22 = arith.divf %20, %21 : vector<8x128xf32>
    %23 = vector.extract_strided_slice %16 {offsets = [0, 128], sizes = [8, 128], strides = [1, 1]} : vector<8x512xf32> to vector<8x128xf32>
    %24 = arith.negf %23 : vector<8x128xf32>
    %25 = math.exp %24 : vector<8x128xf32>
    %cst_17 = arith.constant 1.000000e+00 : f32
    %26 = vector.broadcast %cst_17 : f32 to vector<8x128xf32>
    %27 = arith.addf %26, %25 : vector<8x128xf32>
    %28 = arith.divf %26, %27 : vector<8x128xf32>
    %29 = vector.extract_strided_slice %16 {offsets = [0, 256], sizes = [8, 128], strides = [1, 1]} : vector<8x512xf32> to vector<8x128xf32>
    %30 = math.tanh %29 : vector<8x128xf32>
    %31 = vector.extract_strided_slice %16 {offsets = [0, 384], sizes = [8, 128], strides = [1, 1]} : vector<8x512xf32> to vector<8x128xf32>
    %32 = arith.negf %31 : vector<8x128xf32>
    %33 = math.exp %32 : vector<8x128xf32>
    %cst_18 = arith.constant 1.000000e+00 : f32
    %34 = vector.broadcast %cst_18 : f32 to vector<8x128xf32>
    %35 = arith.addf %34, %33 : vector<8x128xf32>
    %36 = arith.divf %34, %35 : vector<8x128xf32>
    %c0_19 = arith.constant 0 : index
    %c0_20 = arith.constant 0 : index
    %37 = vector.load %arg7[%c0_19, %c0_20] : memref<8x128xf32, #tpu.memory_space<vmem>>, vector<8x128xf32>
    %38 = arith.mulf %28, %37 : vector<8x128xf32>
    %39 = arith.mulf %22, %30 : vector<8x128xf32>
    %40 = arith.addf %38, %39 : vector<8x128xf32>
    %41 = math.tanh %40 : vector<8x128xf32>
    %42 = arith.mulf %36, %41 : vector<8x128xf32>
    %c0_21 = arith.constant 0 : index
    %c0_22 = arith.constant 0 : index
    %43 = vector.load %arg11[%c0_21, %c0_22] : memref<8x128xf32, #tpu.memory_space<vmem>>, vector<8x128xf32>
    tpu.vector_store %arg11[%c0_21, %c0_22], %42 {strides = array<i32>} : memref<8x128xf32, #tpu.memory_space<vmem>>, vector<8x128xf32>,
    %c0_23 = arith.constant 0 : index
    %c0_24 = arith.constant 0 : index
    %44 = vector.load %arg12[%c0_23, %c0_24] : memref<8x128xf32, #tpu.memory_space<vmem>>, vector<8x128xf32>
    tpu.vector_store %arg12[%c0_23, %c0_24], %40 {strides = array<i32>} : memref<8x128xf32, #tpu.memory_space<vmem>>, vector<8x128xf32>,
    %c0_25 = arith.constant 0 : index
    %c0_26 = arith.constant 0 : index
    %45 = vector.load %arg8[%c0_25, %c0_26] : memref<128x128xf32, #tpu.memory_space<vmem>>, vector<128x128xf32>
    %cst_27 = arith.constant dense<0.000000e+00> : vector<8x128xf32>
    %46 = tpu.matmul %42, %45, %cst_27 {dimension_numbers = #tpu.dot_dimension_numbers<[1], [0], [0], [1], [0, 0, 1, 1], [], []>} : vector<8x128xf32>, vector<128x128xf32>, vector<8x128xf32> -> vector<8x128xf32>
    %c0_28 = arith.constant 0 : index
    %c0_29 = arith.constant 0 : index
    %47 = vector.load %arg9[%c0_28, %c0_29] : memref<1x128xf32, #tpu.memory_space<vmem>>, vector<1x128xf32>
    %48 = vector.broadcast %47 : vector<1x128xf32> to vector<8x128xf32>
    %49 = arith.addf %46, %48 : vector<8x128xf32>
    %c0_30 = arith.constant 0 : index
    %c0_31 = arith.constant 0 : index
    %50 = vector.load %arg10[%c0_30, %c0_31] : memref<8x128xf32, #tpu.memory_space<vmem>>, vector<8x128xf32>
    tpu.vector_store %arg10[%c0_30, %c0_31], %49 {strides = array<i32>} : memref<8x128xf32, #tpu.memory_space<vmem>>, vector<8x128xf32>,
    return
  }
}

</mosaic_0001>

<llo_original>
// kernel: _lambda_.1
$region0: #{_lambda_.1}
  #allocation0 [shape = 'u32[]', space=smem, size = 0x4, offset = 0x4, fixed_abs, tag = 'smem constant byte address 0x4 - core index']
  #allocation1 [shape = 'u32[144,128]{1,0:T(1,128)}', space=vmem, size = 0x12000, scoped, tag = 'internal scratch']
  %s0 = inlined_call_operand.vmem [shape: f32[8,1024], index: 0, kind: input, shape index: {}]
  %s1 = inlined_call_operand.hbm [shape: f32[1024,128], index: 1, kind: input, shape index: {}]
  %s2 = inlined_call_operand.vmem [shape: f32[1,128], index: 2, kind: input, shape index: {}]
  %s3 = inlined_call_operand.hbm [shape: f32[128,512], index: 3, kind: input, shape index: {}]
  %s4 = inlined_call_operand.hbm [shape: f32[128,512], index: 4, kind: input, shape index: {}]
  %s5 = inlined_call_operand.vmem [shape: f32[1,512], index: 5, kind: input, shape index: {}]
  %s6 = inlined_call_operand.vmem [shape: f32[8,128], index: 6, kind: input, shape index: {}]
  %s7 = inlined_call_operand.vmem [shape: f32[8,128], index: 7, kind: input, shape index: {}]
  %s8 = inlined_call_operand.vmem [shape: f32[128,128], index: 8, kind: input, shape index: {}]
  %s9 = inlined_call_operand.vmem [shape: f32[1,128], index: 9, kind: input, shape index: {}]
  %s10 = inlined_call_operand.vmem [shape: f32[8,128], index: 10, kind: output, shape index: {0}]
  %s11 = inlined_call_operand.vmem [shape: f32[8,128], index: 11, kind: output, shape index: {1}]
  %s12 = inlined_call_operand.vmem [shape: f32[8,128], index: 12, kind: output, shape index: {2}]
  %13 = xla_tuple %s10, %s11, %s12
  %s14 = sld [smem:[#allocation0]]
  $region78: #{_lambda_.1} parent=0
    _
  %s16 = ssub.s32 1, %s14
  %s17 = scalar_select 0, %s16, %s14
  $region1: #{_lambda_.1} parent=0
    #allocation2 [shape = 'u8[524288]{0}', space=vmem, size = 0x80000, scoped, tag = 'input window, operand 1, single buffered']
    #allocation3 [shape = 's32[1]{0}', space=sflag, size = 0x4, scoped, tag = 'scoped memory for _lambda_.1']
    #allocation4 [shape = 'u8[262144]{0}', space=vmem, size = 0x40000, scoped, tag = 'input window, operand 3, single buffered']
    #allocation5 [shape = 's32[1]{0}', space=sflag, size = 0x4, scoped, tag = 'scoped memory for _lambda_.1']
    #allocation6 [shape = 'u8[262144]{0}', space=vmem, size = 0x40000, scoped, tag = 'input window, operand 4, single buffered']
    %18 = vsyncpa [#allocation3], 0
    %19 = vsyncpa [#allocation5], 0
    // Predicated region
    $region2: #{_lambda_.1} parent=1 // pred_check
      _
    $region3: #{_lambda_.1} parent=1 // pred_check_branch
      %21 = sbr.rel (0) target = $region5
    $region4: #{_lambda_.1} parent=1 // pred_region
      _
    $region5: #{_lambda_.1} parent=1 // pred_fallthru
      _
    // Predicated region
    $region6: #{_lambda_.1} parent=1 // pred_check
      _
    $region7: #{_lambda_.1} parent=1 // pred_check_branch
      %23 = sbr.rel (0) target = $region9
    $region8: #{_lambda_.1} parent=1 // pred_region
      %s25 = ssub.s32 16384, 16384
      %26 = vsyncadd [#allocation3], %s25
      %s27 = sshll.u32 [#allocation2], 4
      %s28 = int_to_ptr.vmem [resolvable:$true] %s27
      %33 = dma.hbm_to_vmem [thread:$0]  %s1, 16384, %s28, [#allocation3], 128, 128, 8
    $region9: #{_lambda_.1} parent=1 // pred_fallthru
      _
    // Predicated region
    $region10: #{_lambda_.1} parent=1 // pred_check
      _
    $region11: #{_lambda_.1} parent=1 // pred_check_branch
      %35 = sbr.rel (0) target = $region13
    $region12: #{_lambda_.1} parent=1 // pred_region
      _
    $region13: #{_lambda_.1} parent=1 // pred_fallthru
      _
    // Predicated region
    $region14: #{_lambda_.1} parent=1 // pred_check
      _
    $region15: #{_lambda_.1} parent=1 // pred_check_branch
      %37 = sbr.rel (0) target = $region17
    $region16: #{_lambda_.1} parent=1 // pred_region
      %s39 = ssub.s32 8192, 8192
      %40 = vsyncadd [#allocation5], %s39
      %s41 = sshll.u32 [#allocation4], 4
      %s42 = int_to_ptr.vmem [resolvable:$true] %s41
      %47 = dma.hbm_to_vmem [thread:$0]  %s3, 8192, %s42, [#allocation5], 512, 512, 32
    $region17: #{_lambda_.1} parent=1 // pred_fallthru
      _
    // Predicated region
    $region18: #{_lambda_.1} parent=1 // pred_check
      _
    $region19: #{_lambda_.1} parent=1 // pred_check_branch
      %49 = sbr.rel (0) target = $region21
    $region20: #{_lambda_.1} parent=1 // pred_region
      %s51 = ssub.s32 8192, 8192
      %52 = vsyncadd [#allocation5], %s51
      %s53 = sshll.u32 [#allocation6], 4
      %s54 = int_to_ptr.vmem [resolvable:$true] %s53
      %59 = dma.hbm_to_vmem [thread:$0]  %s4, 8192, %s54, [#allocation5], 512, 512, 32
    $region21: #{_lambda_.1} parent=1 // pred_fallthru
      _
    // Predicated region
    $region22: #{_lambda_.1} parent=1 // pred_check
      _
    $region23: #{_lambda_.1} parent=1 // pred_check_branch
      %61 = sbr.rel (0) target = $region25
    $region24: #{_lambda_.1} parent=1 // pred_region
      _
    $region25: #{_lambda_.1} parent=1 // pred_fallthru
      _
    // Predicated region
    $region26: #{_lambda_.1} parent=1 // pred_check
      _
    $region27: #{_lambda_.1} parent=1 // pred_check_branch
      %63 = sbr.rel (0) target = $region29
    $region28: #{_lambda_.1} parent=1 // pred_region
      _
    $region29: #{_lambda_.1} parent=1 // pred_fallthru
      _
    // Predicated region
    $region30: #{_lambda_.1} parent=1 // pred_check
      _
    $region31: #{_lambda_.1} parent=1 // pred_check_branch
      %65 = sbr.rel (0) target = $region33
    $region32: #{_lambda_.1} parent=1 // pred_region
      _
    $region33: #{_lambda_.1} parent=1 // pred_fallthru
      _
    // Predicated region
    $region34: #{_lambda_.1} parent=1 // pred_check
      _
    $region35: #{_lambda_.1} parent=1 // pred_check_branch
      %67 = sbr.rel (0) target = $region37
    $region36: #{_lambda_.1} parent=1 // pred_region
      _
    $region37: #{_lambda_.1} parent=1 // pred_fallthru
      _
    // Predicated region
    $region38: #{_lambda_.1} parent=1 // pred_check
      _
    $region39: #{_lambda_.1} parent=1 // pred_check_branch
      %69 = sbr.rel (0) target = $region41
    $region40: #{_lambda_.1} parent=1 // pred_region
      _
    $region41: #{_lambda_.1} parent=1 // pred_fallthru
      _
    // Predicated region
    $region42: #{_lambda_.1} parent=1 // pred_check
      _
    $region43: #{_lambda_.1} parent=1 // pred_check_branch
      %71 = sbr.rel (0) target = $region45
    $region44: #{_lambda_.1} parent=1 // pred_region
      %72 = dma.done [#allocation3], 16384
    $region45: #{_lambda_.1} parent=1 // pred_fallthru
      _
    // Predicated region
    $region46: #{_lambda_.1} parent=1 // pred_check
      _
    $region47: #{_lambda_.1} parent=1 // pred_check_branch
      %74 = sbr.rel (0) target = $region49
    $region48: #{_lambda_.1} parent=1 // pred_region
      %75 = dma.done [#allocation5], 8192
    $region49: #{_lambda_.1} parent=1 // pred_fallthru
      _
    // Predicated region
    $region50: #{_lambda_.1} parent=1 // pred_check
      _
    $region51: #{_lambda_.1} parent=1 // pred_check_branch
      %77 = sbr.rel (0) target = $region53
    $region52: #{_lambda_.1} parent=1 // pred_region
      %78 = dma.done [#allocation5], 8192
    $region53: #{_lambda_.1} parent=1 // pred_fallthru
      _
    %v79 = vld [vmem:[%s0] sm:$0xff]
    %v80 = vld [vmem:[%s0 + $0x8] sm:$0xff]
    %v81 = vld [vmem:[%s0 + $0x10] sm:$0xff]
    %v82 = vld [vmem:[%s0 + $0x18] sm:$0xff]
    %v83 = vld [vmem:[%s0 + $0x20] sm:$0xff]
    %v84 = vld [vmem:[%s0 + $0x28] sm:$0xff]
    %v85 = vld [vmem:[%s0 + $0x30] sm:$0xff]
    %v86 = vld [vmem:[%s0 + $0x38] sm:$0xff]
    %v87 = vld [vmem:[#allocation2] sm:$0xff]
    %v88 = vld [vmem:[#allocation2 + $0x8] sm:$0xff]
    %v89 = vld [vmem:[#allocation2 + $0x10] sm:$0xff]
    %v90 = vld [vmem:[#allocation2 + $0x18] sm:$0xff]
    %v91 = vld [vmem:[#allocation2 + $0x20] sm:$0xff]
    %v92 = vld [vmem:[#allocation2 + $0x28] sm:$0xff]
    %v93 = vld [vmem:[#allocation2 + $0x30] sm:$0xff]
    %v94 = vld [vmem:[#allocation2 + $0x38] sm:$0xff]
    %v95 = vld [vmem:[#allocation2 + $0x40] sm:$0xff]
    %v96 = vld [vmem:[#allocation2 + $0x48] sm:$0xff]
    %v97 = vld [vmem:[#allocation2 + $0x50] sm:$0xff]
    %v98 = vld [vmem:[#allocation2 + $0x58] sm:$0xff]
    %v99 = vld [vmem:[#allocation2 + $0x60] sm:$0xff]
    %v100 = vld [vmem:[#allocation2 + $0x68] sm:$0xff]
    %v101 = vld [vmem:[#allocation2 + $0x70] sm:$0xff]
    %v102 = vld [vmem:[#allocation2 + $0x78] sm:$0xff]
    %v103 = vld [vmem:[#allocation2 + $0x80] sm:$0xff]
    %v104 = vld [vmem:[#allocation2 + $0x88] sm:$0xff]
    %v105 = vld [vmem:[#allocation2 + $0x90] sm:$0xff]
    %v106 = vld [vmem:[#allocation2 + $0x98] sm:$0xff]
    %v107 = vld [vmem:[#allocation2 + $0xa0] sm:$0xff]
    %v108 = vld [vmem:[#allocation2 + $0xa8] sm:$0xff]
    %v109 = vld [vmem:[#allocation2 + $0xb0] sm:$0xff]
    %v110 = vld [vmem:[#allocation2 + $0xb8] sm:$0xff]
    %v111 = vld [vmem:[#allocation2 + $0xc0] sm:$0xff]
    %v112 = vld [vmem:[#allocation2 + $0xc8] sm:$0xff]
    %v113 = vld [vmem:[#allocation2 + $0xd0] sm:$0xff]
    %v114 = vld [vmem:[#allocation2 + $0xd8] sm:$0xff]
    %v115 = vld [vmem:[#allocation2 + $0xe0] sm:$0xff]
    %v116 = vld [vmem:[#allocation2 + $0xe8] sm:$0xff]
    %v117 = vld [vmem:[#allocation2 + $0xf0] sm:$0xff]
    %v118 = vld [vmem:[#allocation2 + $0xf8] sm:$0xff]
    %v119 = vld [vmem:[#allocation2 + $0x100] sm:$0xff]
    %v120 = vld [vmem:[#allocation2 + $0x108] sm:$0xff]
    %v121 = vld [vmem:[#allocation2 + $0x110] sm:$0xff]
    %v122 = vld [vmem:[#allocation2 + $0x118] sm:$0xff]
    %v123 = vld [vmem:[#allocation2 + $0x120] sm:$0xff]
    %v124 = vld [vmem:[#allocation2 + $0x128] sm:$0xff]
    %v125 = vld [vmem:[#allocation2 + $0x130] sm:$0xff]
    %v126 = vld [vmem:[#allocation2 + $0x138] sm:$0xff]
    %v127 = vld [vmem:[#allocation2 + $0x140] sm:$0xff]
    %v128 = vld [vmem:[#allocation2 + $0x148] sm:$0xff]
    %v129 = vld [vmem:[#allocation2 + $0x150] sm:$0xff]
    %v130 = vld [vmem:[#allocation2 + $0x158] sm:$0xff]
    %v131 = vld [vmem:[#allocation2 + $0x160] sm:$0xff]
    %v132 = vld [vmem:[#allocation2 + $0x168] sm:$0xff]
    %v133 = vld [vmem:[#allocation2 + $0x170] sm:$0xff]
    %v134 = vld [vmem:[#allocation2 + $0x178] sm:$0xff]
    %v135 = vld [vmem:[#allocation2 + $0x180] sm:$0xff]
    %v136 = vld [vmem:[#allocation2 + $0x188] sm:$0xff]
    %v137 = vld [vmem:[#allocation2 + $0x190] sm:$0xff]
    %v138 = vld [vmem:[#allocation2 + $0x198] sm:$0xff]
    %v139 = vld [vmem:[#allocation2 + $0x1a0] sm:$0xff]
    %v140 = vld [vmem:[#allocation2 + $0x1a8] sm:$0xff]
    %v141 = vld [vmem:[#allocation2 + $0x1b0] sm:$0xff]
    %v142 = vld [vmem:[#allocation2 + $0x1b8] sm:$0xff]
    %v143 = vld [vmem:[#allocation2 + $0x1c0] sm:$0xff]
    %v144 = vld [vmem:[#allocation2 + $0x1c8] sm:$0xff]
    %v145 = vld [vmem:[#allocation2 + $0x1d0] sm:$0xff]
    %v146 = vld [vmem:[#allocation2 + $0x1d8] sm:$0xff]
    %v147 = vld [vmem:[#allocation2 + $0x1e0] sm:$0xff]
    %v148 = vld [vmem:[#allocation2 + $0x1e8] sm:$0xff]
    %v149 = vld [vmem:[#allocation2 + $0x1f0] sm:$0xff]
    %v150 = vld [vmem:[#allocation2 + $0x1f8] sm:$0xff]
    %v151 = vld [vmem:[#allocation2 + $0x200] sm:$0xff]
    %v152 = vld [vmem:[#allocation2 + $0x208] sm:$0xff]
    %v153 = vld [vmem:[#allocation2 + $0x210] sm:$0xff]
    %v154 = vld [vmem:[#allocation2 + $0x218] sm:$0xff]
    %v155 = vld [vmem:[#allocation2 + $0x220] sm:$0xff]
    %v156 = vld [vmem:[#allocation2 + $0x228] sm:$0xff]
    %v157 = vld [vmem:[#allocation2 + $0x230] sm:$0xff]
    %v158 = vld [vmem:[#allocation2 + $0x238] sm:$0xff]
    %v159 = vld [vmem:[#allocation2 + $0x240] sm:$0xff]
    %v160 = vld [vmem:[#allocation2 + $0x248] sm:$0xff]
    %v161 = vld [vmem:[#allocation2 + $0x250] sm:$0xff]
    %v162 = vld [vmem:[#allocation2 + $0x258] sm:$0xff]
    %v163 = vld [vmem:[#allocation2 + $0x260] sm:$0xff]
    %v164 = vld [vmem:[#allocation2 + $0x268] sm:$0xff]
    %v165 = vld [vmem:[#allocation2 + $0x270] sm:$0xff]
    %v166 = vld [vmem:[#allocation2 + $0x278] sm:$0xff]
    %v167 = vld [vmem:[#allocation2 + $0x280] sm:$0xff]
    %v168 = vld [vmem:[#allocation2 + $0x288] sm:$0xff]
    %v169 = vld [vmem:[#allocation2 + $0x290] sm:$0xff]
    %v170 = vld [vmem:[#allocation2 + $0x298] sm:$0xff]
    %v171 = vld [vmem:[#allocation2 + $0x2a0] sm:$0xff]
    %v172 = vld [vmem:[#allocation2 + $0x2a8] sm:$0xff]
    %v173 = vld [vmem:[#allocation2 + $0x2b0] sm:$0xff]
    %v174 = vld [vmem:[#allocation2 + $0x2b8] sm:$0xff]
    %v175 = vld [vmem:[#allocation2 + $0x2c0] sm:$0xff]
    %v176 = vld [vmem:[#allocation2 + $0x2c8] sm:$0xff]
    %v177 = vld [vmem:[#allocation2 + $0x2d0] sm:$0xff]
    %v178 = vld [vmem:[#allocation2 + $0x2d8] sm:$0xff]
    %v179 = vld [vmem:[#allocation2 + $0x2e0] sm:$0xff]
    %v180 = vld [vmem:[#allocation2 + $0x2e8] sm:$0xff]
    %v181 = vld [vmem:[#allocation2 + $0x2f0] sm:$0xff]
    %v182 = vld [vmem:[#allocation2 + $0x2f8] sm:$0xff]
    %v183 = vld [vmem:[#allocation2 + $0x300] sm:$0xff]
    %v184 = vld [vmem:[#allocation2 + $0x308] sm:$0xff]
    %v185 = vld [vmem:[#allocation2 + $0x310] sm:$0xff]
    %v186 = vld [vmem:[#allocation2 + $0x318] sm:$0xff]
    %v187 = vld [vmem:[#allocation2 + $0x320] sm:$0xff]
    %v188 = vld [vmem:[#allocation2 + $0x328] sm:$0xff]
    %v189 = vld [vmem:[#allocation2 + $0x330] sm:$0xff]
    %v190 = vld [vmem:[#allocation2 + $0x338] sm:$0xff]
    %v191 = vld [vmem:[#allocation2 + $0x340] sm:$0xff]
    %v192 = vld [vmem:[#allocation2 + $0x348] sm:$0xff]
    %v193 = vld [vmem:[#allocation2 + $0x350] sm:$0xff]
    %v194 = vld [vmem:[#allocation2 + $0x358] sm:$0xff]
    %v195 = vld [vmem:[#allocation2 + $0x360] sm:$0xff]
    %v196 = vld [vmem:[#allocation2 + $0x368] sm:$0xff]
    %v197 = vld [vmem:[#allocation2 + $0x370] sm:$0xff]
    %v198 = vld [vmem:[#allocation2 + $0x378] sm:$0xff]
    %v199 = vld [vmem:[#allocation2 + $0x380] sm:$0xff]
    %v200 = vld [vmem:[#allocation2 + $0x388] sm:$0xff]
    %v201 = vld [vmem:[#allocation2 + $0x390] sm:$0xff]
    %v202 = vld [vmem:[#allocation2 + $0x398] sm:$0xff]
    %v203 = vld [vmem:[#allocation2 + $0x3a0] sm:$0xff]
    %v204 = vld [vmem:[#allocation2 + $0x3a8] sm:$0xff]
    %v205 = vld [vmem:[#allocation2 + $0x3b0] sm:$0xff]
    %v206 = vld [vmem:[#allocation2 + $0x3b8] sm:$0xff]
    %v207 = vld [vmem:[#allocation2 + $0x3c0] sm:$0xff]
    %v208 = vld [vmem:[#allocation2 + $0x3c8] sm:$0xff]
    %v209 = vld [vmem:[#allocation2 + $0x3d0] sm:$0xff]
    %v210 = vld [vmem:[#allocation2 + $0x3d8] sm:$0xff]
    %v211 = vld [vmem:[#allocation2 + $0x3e0] sm:$0xff]
    %v212 = vld [vmem:[#allocation2 + $0x3e8] sm:$0xff]
    %v213 = vld [vmem:[#allocation2 + $0x3f0] sm:$0xff]
    %v214 = vld [vmem:[#allocation2 + $0x3f8] sm:$0xff]
    %v215 = vld [vmem:[%s2] sm:$0x1]
    %v217 = vlaneseq
    %v218 = vshrl.u32 %v217, 7
    %v219 = vsub.s32 0, %v218
    %v220 = vrot.slane %v215, %v219
    %222 = vmatprep.subr.mxu0 0.0
    %223 = vmatpush1.msra.mxu0 %v102
    %224 = vmatprep.subr.mxu0 0.0
    %225 = vmatpush1.msra.mxu0 %v101
    %226 = vmatprep.subr.mxu0 0.0
    %227 = vmatpush1.msra.mxu0 %v100
    %228 = vmatprep.subr.mxu0 0.0
    %229 = vmatpush1.msra.mxu0 %v99
    %230 = vmatprep.subr.mxu0 0.0
    %231 = vmatpush1.msra.mxu0 %v98
    %232 = vmatprep.subr.mxu0 0.0
    %233 = vmatpush1.msra.mxu0 %v97
    %234 = vmatprep.subr.mxu0 0.0
    %235 = vmatpush1.msra.mxu0 %v96
    %236 = vmatprep.subr.mxu0 0.0
    %237 = vmatpush1.msra.mxu0 %v95
    %238 = vmatprep.subr.mxu0 0.0
    %239 = vmatpush1.msra.mxu0 %v94
    %240 = vmatprep.subr.mxu0 0.0
    %241 = vmatpush1.msra.mxu0 %v93
    %242 = vmatprep.subr.mxu0 0.0
    %243 = vmatpush1.msra.mxu0 %v92
    %244 = vmatprep.subr.mxu0 0.0
    %245 = vmatpush1.msra.mxu0 %v91
    %246 = vmatprep.subr.mxu0 0.0
    %247 = vmatpush1.msra.mxu0 %v90
    %248 = vmatprep.subr.mxu0 0.0
    %249 = vmatpush1.msra.mxu0 %v89
    %250 = vmatprep.subr.mxu0 0.0
    %251 = vmatpush1.msra.mxu0 %v88
    %252 = vmatprep.subr.mxu0 0.0
    %253 = vmatpush1.msra.mxu0 %v87
    %254 = vmatprep.subr.mxu0 0.0
    %255 = vmatpush2.msra.mxu0 %v118
    %256 = vmatprep.subr.mxu0 0.0
    %257 = vmatpush2.msra.mxu0 %v117
    %258 = vmatprep.subr.mxu0 0.0
    %259 = vmatpush2.msra.mxu0 %v116
    %260 = vmatprep.subr.mxu0 0.0
    %261 = vmatpush2.msra.mxu0 %v115
    %262 = vmatprep.subr.mxu0 0.0
    %263 = vmatpush2.msra.mxu0 %v114
    %264 = vmatprep.subr.mxu0 0.0
    %265 = vmatpush2.msra.mxu0 %v113
    %266 = vmatprep.subr.mxu0 0.0
    %267 = vmatpush2.msra.mxu0 %v112
    %268 = vmatprep.subr.mxu0 0.0
    %269 = vmatpush2.msra.mxu0 %v111
    %270 = vmatprep.subr.mxu0 0.0
    %271 = vmatpush2.msra.mxu0 %v110
    %272 = vmatprep.subr.mxu0 0.0
    %273 = vmatpush2.msra.mxu0 %v109
    %274 = vmatprep.subr.mxu0 0.0
    %275 = vmatpush2.msra.mxu0 %v108
    %276 = vmatprep.subr.mxu0 0.0
    %277 = vmatpush2.msra.mxu0 %v107
    %278 = vmatprep.subr.mxu0 0.0
    %279 = vmatpush2.msra.mxu0 %v106
    %280 = vmatprep.subr.mxu0 0.0
    %281 = vmatpush2.msra.mxu0 %v105
    %282 = vmatprep.subr.mxu0 0.0
    %283 = vmatpush2.msra.mxu0 %v104
    %284 = vmatprep.subr.mxu0 0.0
    %285 = vmatpush2.msra.mxu0 %v103
    %286 = vmatprep.mubr.f32.mxu0 %v80
    %287 = vmatmul.mubr.f32.gmra.mxu0 %v79
    %v288 = vpop.f32.mrf.mxu0
    %v289 = vadd.f32 %v220, %v288
    %v290 = vpop.f32.mrf.mxu0
    %291 = vdwg.mxu0
    %292 = vmatprep.subr.mxu0 0.0
    %293 = vmatpush1.msra.mxu0 %v134
    %294 = vmatprep.subr.mxu0 0.0
    %295 = vmatpush1.msra.mxu0 %v133
    %296 = vmatprep.subr.mxu0 0.0
    %297 = vmatpush1.msra.mxu0 %v132
    %298 = vmatprep.subr.mxu0 0.0
    %299 = vmatpush1.msra.mxu0 %v131
    %300 = vmatprep.subr.mxu0 0.0
    %301 = vmatpush1.msra.mxu0 %v130
    %302 = vmatprep.subr.mxu0 0.0
    %303 = vmatpush1.msra.mxu0 %v129
    %304 = vmatprep.subr.mxu0 0.0
    %305 = vmatpush1.msra.mxu0 %v128
    %306 = vmatprep.subr.mxu0 0.0
    %307 = vmatpush1.msra.mxu0 %v127
    %308 = vmatprep.subr.mxu0 0.0
    %309 = vmatpush1.msra.mxu0 %v126
    %310 = vmatprep.subr.mxu0 0.0
    %311 = vmatpush1.msra.mxu0 %v125
    %312 = vmatprep.subr.mxu0 0.0
    %313 = vmatpush1.msra.mxu0 %v124
    %314 = vmatprep.subr.mxu0 0.0
    %315 = vmatpush1.msra.mxu0 %v123
    %316 = vmatprep.subr.mxu0 0.0
    %317 = vmatpush1.msra.mxu0 %v122
    %318 = vmatprep.subr.mxu0 0.0
    %319 = vmatpush1.msra.mxu0 %v121
    %320 = vmatprep.subr.mxu0 0.0
    %321 = vmatpush1.msra.mxu0 %v120
    %322 = vmatprep.subr.mxu0 0.0
    %323 = vmatpush1.msra.mxu0 %v119
    %324 = vmatprep.subr.mxu0 0.0
    %325 = vmatpush2.msra.mxu0 %v150
    %326 = vmatprep.subr.mxu0 0.0
    %327 = vmatpush2.msra.mxu0 %v149
    %328 = vmatprep.subr.mxu0 0.0
    %329 = vmatpush2.msra.mxu0 %v148
    %330 = vmatprep.subr.mxu0 0.0
    %331 = vmatpush2.msra.mxu0 %v147
    %332 = vmatprep.subr.mxu0 0.0
    %333 = vmatpush2.msra.mxu0 %v146
    %334 = vmatprep.subr.mxu0 0.0
    %335 = vmatpush2.msra.mxu0 %v145
    %336 = vmatprep.subr.mxu0 0.0
    %337 = vmatpush2.msra.mxu0 %v144
    %338 = vmatprep.subr.mxu0 0.0
    %339 = vmatpush2.msra.mxu0 %v143
    %340 = vmatprep.subr.mxu0 0.0
    %341 = vmatpush2.msra.mxu0 %v142
    %342 = vmatprep.subr.mxu0 0.0
    %343 = vmatpush2.msra.mxu0 %v141
    %344 = vmatprep.subr.mxu0 0.0
    %345 = vmatpush2.msra.mxu0 %v140
    %346 = vmatprep.subr.mxu0 0.0
    %347 = vmatpush2.msra.mxu0 %v139
    %348 = vmatprep.subr.mxu0 0.0
    %349 = vmatpush2.msra.mxu0 %v138
    %350 = vmatprep.subr.mxu0 0.0
    %351 = vmatpush2.msra.mxu0 %v137
    %352 = vmatprep.subr.mxu0 0.0
    %353 = vmatpush2.msra.mxu0 %v136
    %354 = vmatprep.subr.mxu0 0.0
    %355 = vmatpush2.msra.mxu0 %v135
    %356 = vmatprep.mubr.f32.mxu0 %v82
    %357 = vmatmul.mubr.f32.gmra.mxu0 %v81
    %v358 = vpop.f32.mrf.mxu0
    %v359 = vadd.f32 %v289, %v358
    %v360 = vpop.f32.mrf.mxu0
    %361 = vdwg.mxu0
    %362 = vmatprep.subr.mxu0 0.0
    %363 = vmatpush1.msra.mxu0 %v166
    %364 = vmatprep.subr.mxu0 0.0
    %365 = vmatpush1.msra.mxu0 %v165
    %366 = vmatprep.subr.mxu0 0.0
    %367 = vmatpush1.msra.mxu0 %v164
    %368 = vmatprep.subr.mxu0 0.0
    %369 = vmatpush1.msra.mxu0 %v163
    %370 = vmatprep.subr.mxu0 0.0
    %371 = vmatpush1.msra.mxu0 %v162
    %372 = vmatprep.subr.mxu0 0.0
    %373 = vmatpush1.msra.mxu0 %v161
    %374 = vmatprep.subr.mxu0 0.0
    %375 = vmatpush1.msra.mxu0 %v160
    %376 = vmatprep.subr.mxu0 0.0
    %377 = vmatpush1.msra.mxu0 %v159
    %378 = vmatprep.subr.mxu0 0.0
    %379 = vmatpush1.msra.mxu0 %v158
    %380 = vmatprep.subr.mxu0 0.0
    %381 = vmatpush1.msra.mxu0 %v157
    %382 = vmatprep.subr.mxu0 0.0
    %383 = vmatpush1.msra.mxu0 %v156
    %384 = vmatprep.subr.mxu0 0.0
    %385 = vmatpush1.msra.mxu0 %v155
    %386 = vmatprep.subr.mxu0 0.0
    %387 = vmatpush1.msra.mxu0 %v154
    %388 = vmatprep.subr.mxu0 0.0
    %389 = vmatpush1.msra.mxu0 %v153
    %390 = vmatprep.subr.mxu0 0.0
    %391 = vmatpush1.msra.mxu0 %v152
    %392 = vmatprep.subr.mxu0 0.0
    %393 = vmatpush1.msra.mxu0 %v151
    %394 = vmatprep.subr.mxu0 0.0
    %395 = vmatpush2.msra.mxu0 %v182
    %396 = vmatprep.subr.mxu0 0.0
    %397 = vmatpush2.msra.mxu0 %v181
    %398 = vmatprep.subr.mxu0 0.0
    %399 = vmatpush2.msra.mxu0 %v180
    %400 = vmatprep.subr.mxu0 0.0
    %401 = vmatpush2.msra.mxu0 %v179
    %402 = vmatprep.subr.mxu0 0.0
    %403 = vmatpush2.msra.mxu0 %v178
    %404 = vmatprep.subr.mxu0 0.0
    %405 = vmatpush2.msra.mxu0 %v177
    %406 = vmatprep.subr.mxu0 0.0
    %407 = vmatpush2.msra.mxu0 %v176
    %408 = vmatprep.subr.mxu0 0.0
    %409 = vmatpush2.msra.mxu0 %v175
    %410 = vmatprep.subr.mxu0 0.0
    %411 = vmatpush2.msra.mxu0 %v174
    %412 = vmatprep.subr.mxu0 0.0
    %413 = vmatpush2.msra.mxu0 %v173
    %414 = vmatprep.subr.mxu0 0.0
    %415 = vmatpush2.msra.mxu0 %v172
    %416 = vmatprep.subr.mxu0 0.0
    %417 = vmatpush2.msra.mxu0 %v171
    %418 = vmatprep.subr.mxu0 0.0
    %419 = vmatpush2.msra.mxu0 %v170
    %420 = vmatprep.subr.mxu0 0.0
    %421 = vmatpush2.msra.mxu0 %v169
    %422 = vmatprep.subr.mxu0 0.0
    %423 = vmatpush2.msra.mxu0 %v168
    %424 = vmatprep.subr.mxu0 0.0
    %425 = vmatpush2.msra.mxu0 %v167
    %426 = vmatprep.mubr.f32.mxu0 %v84
    %427 = vmatmul.mubr.f32.gmra.mxu0 %v83
    %v428 = vpop.f32.mrf.mxu0
    %v429 = vadd.f32 %v359, %v428
    %v430 = vpop.f32.mrf.mxu0
    %431 = vdwg.mxu0
    %432 = vmatprep.subr.mxu0 0.0
    %433 = vmatpush1.msra.mxu0 %v198
    %434 = vmatprep.subr.mxu0 0.0
    %435 = vmatpush1.msra.mxu0 %v197
    %436 = vmatprep.subr.mxu0 0.0
    %437 = vmatpush1.msra.mxu0 %v196
    %438 = vmatprep.subr.mxu0 0.0
    %439 = vmatpush1.msra.mxu0 %v195
    %440 = vmatprep.subr.mxu0 0.0
    %441 = vmatpush1.msra.mxu0 %v194
    %442 = vmatprep.subr.mxu0 0.0
    %443 = vmatpush1.msra.mxu0 %v193
    %444 = vmatprep.subr.mxu0 0.0
    %445 = vmatpush1.msra.mxu0 %v192
    %446 = vmatprep.subr.mxu0 0.0
    %447 = vmatpush1.msra.mxu0 %v191
    %448 = vmatprep.subr.mxu0 0.0
    %449 = vmatpush1.msra.mxu0 %v190
    %450 = vmatprep.subr.mxu0 0.0
    %451 = vmatpush1.msra.mxu0 %v189
    %452 = vmatprep.subr.mxu0 0.0
    %453 = vmatpush1.msra.mxu0 %v188
    %454 = vmatprep.subr.mxu0 0.0
    %455 = vmatpush1.msra.mxu0 %v187
    %456 = vmatprep.subr.mxu0 0.0
    %457 = vmatpush1.msra.mxu0 %v186
    %458 = vmatprep.subr.mxu0 0.0
    %459 = vmatpush1.msra.mxu0 %v185
    %460 = vmatprep.subr.mxu0 0.0
    %461 = vmatpush1.msra.mxu0 %v184
    %462 = vmatprep.subr.mxu0 0.0
    %463 = vmatpush1.msra.mxu0 %v183
    %464 = vmatprep.subr.mxu0 0.0
    %465 = vmatpush2.msra.mxu0 %v214
    %466 = vmatprep.subr.mxu0 0.0
    %467 = vmatpush2.msra.mxu0 %v213
    %468 = vmatprep.subr.mxu0 0.0
    %469 = vmatpush2.msra.mxu0 %v212
    %470 = vmatprep.subr.mxu0 0.0
    %471 = vmatpush2.msra.mxu0 %v211
    %472 = vmatprep.subr.mxu0 0.0
    %473 = vmatpush2.msra.mxu0 %v210
    %474 = vmatprep.subr.mxu0 0.0
    %475 = vmatpush2.msra.mxu0 %v209
    %476 = vmatprep.subr.mxu0 0.0
    %477 = vmatpush2.msra.mxu0 %v208
    %478 = vmatprep.subr.mxu0 0.0
    %479 = vmatpush2.msra.mxu0 %v207
    %480 = vmatprep.subr.mxu0 0.0
    %481 = vmatpush2.msra.mxu0 %v206
    %482 = vmatprep.subr.mxu0 0.0
    %483 = vmatpush2.msra.mxu0 %v205
    %484 = vmatprep.subr.mxu0 0.0
    %485 = vmatpush2.msra.mxu0 %v204
    %486 = vmatprep.subr.mxu0 0.0
    %487 = vmatpush2.msra.mxu0 %v203
    %488 = vmatprep.subr.mxu0 0.0
    %489 = vmatpush2.msra.mxu0 %v202
    %490 = vmatprep.subr.mxu0 0.0
    %491 = vmatpush2.msra.mxu0 %v201
    %492 = vmatprep.subr.mxu0 0.0
    %493 = vmatpush2.msra.mxu0 %v200
    %494 = vmatprep.subr.mxu0 0.0
    %495 = vmatpush2.msra.mxu0 %v199
    %496 = vmatprep.mubr.f32.mxu0 %v86
    %497 = vmatmul.mubr.f32.gmra.mxu0 %v85
    %v498 = vpop.f32.mrf.mxu0
    %v499 = vadd.f32 %v429, %v498
    %v500 = vpop.f32.mrf.mxu0
    %501 = vdwg.mxu0
    %v502 = vmax.f32 %v499, 0.0
    %v503 = vld [vmem:[#allocation4] sm:$0xff]
    %v504 = vld [vmem:[#allocation4 + $0x8] sm:$0xff]
    %v505 = vld [vmem:[#allocation4 + $0x10] sm:$0xff]
    %v506 = vld [vmem:[#allocation4 + $0x18] sm:$0xff]
    %v507 = vld [vmem:[#allocation4 + $0x20] sm:$0xff]
    %v508 = vld [vmem:[#allocation4 + $0x28] sm:$0xff]
    %v509 = vld [vmem:[#allocation4 + $0x30] sm:$0xff]
    %v510 = vld [vmem:[#allocation4 + $0x38] sm:$0xff]
    %v511 = vld [vmem:[#allocation4 + $0x40] sm:$0xff]
    %v512 = vld [vmem:[#allocation4 + $0x48] sm:$0xff]
    %v513 = vld [vmem:[#allocation4 + $0x50] sm:$0xff]
    %v514 = vld [vmem:[#allocation4 + $0x58] sm:$0xff]
    %v515 = vld [vmem:[#allocation4 + $0x60] sm:$0xff]
    %v516 = vld [vmem:[#allocation4 + $0x68] sm:$0xff]
    %v517 = vld [vmem:[#allocation4 + $0x70] sm:$0xff]
    %v518 = vld [vmem:[#allocation4 + $0x78] sm:$0xff]
    %v519 = vld [vmem:[#allocation4 + $0x80] sm:$0xff]
    %v520 = vld [vmem:[#allocation4 + $0x88] sm:$0xff]
    %v521 = vld [vmem:[#allocation4 + $0x90] sm:$0xff]
    %v522 = vld [vmem:[#allocation4 + $0x98] sm:$0xff]
    %v523 = vld [vmem:[#allocation4 + $0xa0] sm:$0xff]
    %v524 = vld [vmem:[#allocation4 + $0xa8] sm:$0xff]
    %v525 = vld [vmem:[#allocation4 + $0xb0] sm:$0xff]
    %v526 = vld [vmem:[#allocation4 + $0xb8] sm:$0xff]
    %v527 = vld [vmem:[#allocation4 + $0xc0] sm:$0xff]
    %v528 = vld [vmem:[#allocation4 + $0xc8] sm:$0xff]
    %v529 = vld [vmem:[#allocation4 + $0xd0] sm:$0xff]
    %v530 = vld [vmem:[#allocation4 + $0xd8] sm:$0xff]
    %v531 = vld [vmem:[#allocation4 + $0xe0] sm:$0xff]
    %v532 = vld [vmem:[#allocation4 + $0xe8] sm:$0xff]
    %v533 = vld [vmem:[#allocation4 + $0xf0] sm:$0xff]
    %v534 = vld [vmem:[#allocation4 + $0xf8] sm:$0xff]
    %v535 = vld [vmem:[#allocation4 + $0x100] sm:$0xff]
    %v536 = vld [vmem:[#allocation4 + $0x108] sm:$0xff]
    %v537 = vld [vmem:[#allocation4 + $0x110] sm:$0xff]
    %v538 = vld [vmem:[#allocation4 + $0x118] sm:$0xff]
    %v539 = vld [vmem:[#allocation4 + $0x120] sm:$0xff]
    %v540 = vld [vmem:[#allocation4 + $0x128] sm:$0xff]
    %v541 = vld [vmem:[#allocation4 + $0x130] sm:$0xff]
    %v542 = vld [vmem:[#allocation4 + $0x138] sm:$0xff]
    %v543 = vld [vmem:[#allocation4 + $0x140] sm:$0xff]
    %v544 = vld [vmem:[#allocation4 + $0x148] sm:$0xff]
    %v545 = vld [vmem:[#allocation4 + $0x150] sm:$0xff]
    %v546 = vld [vmem:[#allocation4 + $0x158] sm:$0xff]
    %v547 = vld [vmem:[#allocation4 + $0x160] sm:$0xff]
    %v548 = vld [vmem:[#allocation4 + $0x168] sm:$0xff]
    %v549 = vld [vmem:[#allocation4 + $0x170] sm:$0xff]
    %v550 = vld [vmem:[#allocation4 + $0x178] sm:$0xff]
    %v551 = vld [vmem:[#allocation4 + $0x180] sm:$0xff]
    %v552 = vld [vmem:[#allocation4 + $0x188] sm:$0xff]
    %v553 = vld [vmem:[#allocation4 + $0x190] sm:$0xff]
    %v554 = vld [vmem:[#allocation4 + $0x198] sm:$0xff]
    %v555 = vld [vmem:[#allocation4 + $0x1a0] sm:$0xff]
    %v556 = vld [vmem:[#allocation4 + $0x1a8] sm:$0xff]
    %v557 = vld [vmem:[#allocation4 + $0x1b0] sm:$0xff]
    %v558 = vld [vmem:[#allocation4 + $0x1b8] sm:$0xff]
    %v559 = vld [vmem:[#allocation4 + $0x1c0] sm:$0xff]
    %v560 = vld [vmem:[#allocation4 + $0x1c8] sm:$0xff]
    %v561 = vld [vmem:[#allocation4 + $0x1d0] sm:$0xff]
    %v562 = vld [vmem:[#allocation4 + $0x1d8] sm:$0xff]
    %v563 = vld [vmem:[#allocation4 + $0x1e0] sm:$0xff]
    %v564 = vld [vmem:[#allocation4 + $0x1e8] sm:$0xff]
    %v565 = vld [vmem:[#allocation4 + $0x1f0] sm:$0xff]
    %v566 = vld [vmem:[#allocation4 + $0x1f8] sm:$0xff]
    %v567 = vld [vmem:[%s6] sm:$0xff]
    %v568 = vld [vmem:[#allocation6] sm:$0xff]
    %v569 = vld [vmem:[#allocation6 + $0x8] sm:$0xff]
    %v570 = vld [vmem:[#allocation6 + $0x10] sm:$0xff]
    %v571 = vld [vmem:[#allocation6 + $0x18] sm:$0xff]
    %v572 = vld [vmem:[#allocation6 + $0x20] sm:$0xff]
    %v573 = vld [vmem:[#allocation6 + $0x28] sm:$0xff]
    %v574 = vld [vmem:[#allocation6 + $0x30] sm:$0xff]
    %v575 = vld [vmem:[#allocation6 + $0x38] sm:$0xff]
    %v576 = vld [vmem:[#allocation6 + $0x40] sm:$0xff]
    %v577 = vld [vmem:[#allocation6 + $0x48] sm:$0xff]
    %v578 = vld [vmem:[#allocation6 + $0x50] sm:$0xff]
    %v579 = vld [vmem:[#allocation6 + $0x58] sm:$0xff]
    %v580 = vld [vmem:[#allocation6 + $0x60] sm:$0xff]
    %v581 = vld [vmem:[#allocation6 + $0x68] sm:$0xff]
    %v582 = vld [vmem:[#allocation6 + $0x70] sm:$0xff]
    %v583 = vld [vmem:[#allocation6 + $0x78] sm:$0xff]
    %v584 = vld [vmem:[#allocation6 + $0x80] sm:$0xff]
    %v585 = vld [vmem:[#allocation6 + $0x88] sm:$0xff]
    %v586 = vld [vmem:[#allocation6 + $0x90] sm:$0xff]
    %v587 = vld [vmem:[#allocation6 + $0x98] sm:$0xff]
    %v588 = vld [vmem:[#allocation6 + $0xa0] sm:$0xff]
    %v589 = vld [vmem:[#allocation6 + $0xa8] sm:$0xff]
    %v590 = vld [vmem:[#allocation6 + $0xb0] sm:$0xff]
    %v591 = vld [vmem:[#allocation6 + $0xb8] sm:$0xff]
    %v592 = vld [vmem:[#allocation6 + $0xc0] sm:$0xff]
    %v593 = vld [vmem:[#allocation6 + $0xc8] sm:$0xff]
    %v594 = vld [vmem:[#allocation6 + $0xd0] sm:$0xff]
    %v595 = vld [vmem:[#allocation6 + $0xd8] sm:$0xff]
    %v596 = vld [vmem:[#allocation6 + $0xe0] sm:$0xff]
    %v597 = vld [vmem:[#allocation6 + $0xe8] sm:$0xff]
    %v598 = vld [vmem:[#allocation6 + $0xf0] sm:$0xff]
    %v599 = vld [vmem:[#allocation6 + $0xf8] sm:$0xff]
    %v600 = vld [vmem:[#allocation6 + $0x100] sm:$0xff]
    %v601 = vld [vmem:[#allocation6 + $0x108] sm:$0xff]
    %v602 = vld [vmem:[#allocation6 + $0x110] sm:$0xff]
    %v603 = vld [vmem:[#allocation6 + $0x118] sm:$0xff]
    %v604 = vld [vmem:[#allocation6 + $0x120] sm:$0xff]
    %v605 = vld [vmem:[#allocation6 + $0x128] sm:$0xff]
    %v606 = vld [vmem:[#allocation6 + $0x130] sm:$0xff]
    %v607 = vld [vmem:[#allocation6 + $0x138] sm:$0xff]
    %v608 = vld [vmem:[#allocation6 + $0x140] sm:$0xff]
    %v609 = vld [vmem:[#allocation6 + $0x148] sm:$0xff]
    %v610 = vld [vmem:[#allocation6 + $0x150] sm:$0xff]
    %v611 = vld [vmem:[#allocation6 + $0x158] sm:$0xff]
    %v612 = vld [vmem:[#allocation6 + $0x160] sm:$0xff]
    %v613 = vld [vmem:[#allocation6 + $0x168] sm:$0xff]
    %v614 = vld [vmem:[#allocation6 + $0x170] sm:$0xff]
    %v615 = vld [vmem:[#allocation6 + $0x178] sm:$0xff]
    %v616 = vld [vmem:[#allocation6 + $0x180] sm:$0xff]
    %v617 = vld [vmem:[#allocation6 + $0x188] sm:$0xff]
    %v618 = vld [vmem:[#allocation6 + $0x190] sm:$0xff]
    %v619 = vld [vmem:[#allocation6 + $0x198] sm:$0xff]
    %v620 = vld [vmem:[#allocation6 + $0x1a0] sm:$0xff]
    %v621 = vld [vmem:[#allocation6 + $0x1a8] sm:$0xff]
    %v622 = vld [vmem:[#allocation6 + $0x1b0] sm:$0xff]
    %v623 = vld [vmem:[#allocation6 + $0x1b8] sm:$0xff]
    %v624 = vld [vmem:[#allocation6 + $0x1c0] sm:$0xff]
    %v625 = vld [vmem:[#allocation6 + $0x1c8] sm:$0xff]
    %v626 = vld [vmem:[#allocation6 + $0x1d0] sm:$0xff]
    %v627 = vld [vmem:[#allocation6 + $0x1d8] sm:$0xff]
    %v628 = vld [vmem:[#allocation6 + $0x1e0] sm:$0xff]
    %v629 = vld [vmem:[#allocation6 + $0x1e8] sm:$0xff]
    %v630 = vld [vmem:[#allocation6 + $0x1f0] sm:$0xff]
    %v631 = vld [vmem:[#allocation6 + $0x1f8] sm:$0xff]
    %632 = vmatprep.subr.mxu0 %v629
    %633 = vmatpush1.msra.mxu0 %v628
    %634 = vmatprep.subr.mxu0 %v625
    %635 = vmatpush1.msra.mxu0 %v624
    %636 = vmatprep.subr.mxu0 %v621
    %637 = vmatpush1.msra.mxu0 %v620
    %638 = vmatprep.subr.mxu0 %v617
    %639 = vmatpush1.msra.mxu0 %v616
    %640 = vmatprep.subr.mxu0 %v613
    %641 = vmatpush1.msra.mxu0 %v612
    %642 = vmatprep.subr.mxu0 %v609
    %643 = vmatpush1.msra.mxu0 %v608
    %644 = vmatprep.subr.mxu0 %v605
    %645 = vmatpush1.msra.mxu0 %v604
    %646 = vmatprep.subr.mxu0 %v601
    %647 = vmatpush1.msra.mxu0 %v600
    %648 = vmatprep.subr.mxu0 %v597
    %649 = vmatpush1.msra.mxu0 %v596
    %650 = vmatprep.subr.mxu0 %v593
    %651 = vmatpush1.msra.mxu0 %v592
    %652 = vmatprep.subr.mxu0 %v589
    %653 = vmatpush1.msra.mxu0 %v588
    %654 = vmatprep.subr.mxu0 %v585
    %655 = vmatpush1.msra.mxu0 %v584
    %656 = vmatprep.subr.mxu0 %v581
    %657 = vmatpush1.msra.mxu0 %v580
    %658 = vmatprep.subr.mxu0 %v577
    %659 = vmatpush1.msra.mxu0 %v576
    %660 = vmatprep.subr.mxu0 %v573
    %661 = vmatpush1.msra.mxu0 %v572
    %662 = vmatprep.subr.mxu0 %v569
    %663 = vmatpush1.msra.mxu0 %v568
    %664 = vmatprep.subr.mxu0 0.0
    %665 = vmatpush2.msra.mxu0 0.0
    %666 = vmatprep.subr.mxu0 0.0
    %667 = vmatpush2.msra.mxu0 0.0
    %668 = vmatprep.subr.mxu0 0.0
    %669 = vmatpush2.msra.mxu0 0.0
    %670 = vmatprep.subr.mxu0 0.0
    %671 = vmatpush2.msra.mxu0 0.0
    %672 = vmatprep.subr.mxu0 0.0
    %673 = vmatpush2.msra.mxu0 0.0
    %674 = vmatprep.subr.mxu0 0.0
    %675 = vmatpush2.msra.mxu0 0.0
    %676 = vmatprep.subr.mxu0 0.0
    %677 = vmatpush2.msra.mxu0 0.0
    %678 = vmatprep.subr.mxu0 0.0
    %679 = vmatpush2.msra.mxu0 0.0
    %680 = vmatprep.subr.mxu0 0.0
    %681 = vmatpush2.msra.mxu0 0.0
    %682 = vmatprep.subr.mxu0 0.0
    %683 = vmatpush2.msra.mxu0 0.0
    %684 = vmatprep.subr.mxu0 0.0
    %685 = vmatpush2.msra.mxu0 0.0
    %686 = vmatprep.subr.mxu0 0.0
    %687 = vmatpush2.msra.mxu0 0.0
    %688 = vmatprep.subr.mxu0 0.0
    %689 = vmatpush2.msra.mxu0 0.0
    %690 = vmatprep.subr.mxu0 0.0
    %691 = vmatpush2.msra.mxu0 0.0
    %692 = vmatprep.subr.mxu0 0.0
    %693 = vmatpush2.msra.mxu0 0.0
    %694 = vmatprep.subr.mxu0 0.0
    %695 = vmatpush2.msra.mxu0 0.0
    %696 = vmatprep.mubr.f32.mxu0 0.0
    %697 = vmatmul.mubr.f32.gmra.mxu0 %v567
    %v698 = vpop.f32.mrf.mxu0
    %v699 = vadd.f32 0.0, %v698
    %v700 = vpop.f32.mrf.mxu0
    %v701 = vadd.f32 0.0, %v700
    %702 = vdwg.mxu0
    %703 = vmatprep.subr.mxu0 %v631
    %704 = vmatpush1.msra.mxu0 %v630
    %705 = vmatprep.subr.mxu0 %v627
    %706 = vmatpush1.msra.mxu0 %v626
    %707 = vmatprep.subr.mxu0 %v623
    %708 = vmatpush1.msra.mxu0 %v622
    %709 = vmatprep.subr.mxu0 %v619
    %710 = vmatpush1.msra.mxu0 %v618
    %711 = vmatprep.subr.mxu0 %v615
    %712 = vmatpush1.msra.mxu0 %v614
    %713 = vmatprep.subr.mxu0 %v611
    %714 = vmatpush1.msra.mxu0 %v610
    %715 = vmatprep.subr.mxu0 %v607
    %716 = vmatpush1.msra.mxu0 %v606
    %717 = vmatprep.subr.mxu0 %v603
    %718 = vmatpush1.msra.mxu0 %v602
    %719 = vmatprep.subr.mxu0 %v599
    %720 = vmatpush1.msra.mxu0 %v598
    %721 = vmatprep.subr.mxu0 %v595
    %722 = vmatpush1.msra.mxu0 %v594
    %723 = vmatprep.subr.mxu0 %v591
    %724 = vmatpush1.msra.mxu0 %v590
    %725 = vmatprep.subr.mxu0 %v587
    %726 = vmatpush1.msra.mxu0 %v586
    %727 = vmatprep.subr.mxu0 %v583
    %728 = vmatpush1.msra.mxu0 %v582
    %729 = vmatprep.subr.mxu0 %v579
    %730 = vmatpush1.msra.mxu0 %v578
    %731 = vmatprep.subr.mxu0 %v575
    %732 = vmatpush1.msra.mxu0 %v574
    %733 = vmatprep.subr.mxu0 %v571
    %734 = vmatpush1.msra.mxu0 %v570
    %735 = vmatprep.subr.mxu0 0.0
    %736 = vmatpush2.msra.mxu0 0.0
    %737 = vmatprep.subr.mxu0 0.0
    %738 = vmatpush2.msra.mxu0 0.0
    %739 = vmatprep.subr.mxu0 0.0
    %740 = vmatpush2.msra.mxu0 0.0
    %741 = vmatprep.subr.mxu0 0.0
    %742 = vmatpush2.msra.mxu0 0.0
    %743 = vmatprep.subr.mxu0 0.0
    %744 = vmatpush2.msra.mxu0 0.0
    %745 = vmatprep.subr.mxu0 0.0
    %746 = vmatpush2.msra.mxu0 0.0
    %747 = vmatprep.subr.mxu0 0.0
    %748 = vmatpush2.msra.mxu0 0.0
    %749 = vmatprep.subr.mxu0 0.0
    %750 = vmatpush2.msra.mxu0 0.0
    %751 = vmatprep.subr.mxu0 0.0
    %752 = vmatpush2.msra.mxu0 0.0
    %753 = vmatprep.subr.mxu0 0.0
    %754 = vmatpush2.msra.mxu0 0.0
    %755 = vmatprep.subr.mxu0 0.0
    %756 = vmatpush2.msra.mxu0 0.0
    %757 = vmatprep.subr.mxu0 0.0
    %758 = vmatpush2.msra.mxu0 0.0
    %759 = vmatprep.subr.mxu0 0.0
    %760 = vmatpush2.msra.mxu0 0.0
    %761 = vmatprep.subr.mxu0 0.0
    %762 = vmatpush2.msra.mxu0 0.0
    %763 = vmatprep.subr.mxu0 0.0
    %764 = vmatpush2.msra.mxu0 0.0
    %765 = vmatprep.subr.mxu0 0.0
    %766 = vmatpush2.msra.mxu0 0.0
    %767 = vmatprep.mubr.f32.mxu0 0.0
    %768 = vmatmul.mubr.f32.gmra.mxu0 %v567
    %v769 = vpop.f32.mrf.mxu0
    %v770 = vadd.f32 0.0, %v769
    %v771 = vpop.f32.mrf.mxu0
    %v772 = vadd.f32 0.0, %v771
    %773 = vdwg.mxu0
    %774 = vmatprep.subr.mxu0 %v564
    %775 = vmatpush1.msra.mxu0 %v563
    %776 = vmatprep.subr.mxu0 %v560
    %777 = vmatpush1.msra.mxu0 %v559
    %778 = vmatprep.subr.mxu0 %v556
    %779 = vmatpush1.msra.mxu0 %v555
    %780 = vmatprep.subr.mxu0 %v552
    %781 = vmatpush1.msra.mxu0 %v551
    %782 = vmatprep.subr.mxu0 %v548
    %783 = vmatpush1.msra.mxu0 %v547
    %784 = vmatprep.subr.mxu0 %v544
    %785 = vmatpush1.msra.mxu0 %v543
    %786 = vmatprep.subr.mxu0 %v540
    %787 = vmatpush1.msra.mxu0 %v539
    %788 = vmatprep.subr.mxu0 %v536
    %789 = vmatpush1.msra.mxu0 %v535
    %790 = vmatprep.subr.mxu0 %v532
    %791 = vmatpush1.msra.mxu0 %v531
    %792 = vmatprep.subr.mxu0 %v528
    %793 = vmatpush1.msra.mxu0 %v527
    %794 = vmatprep.subr.mxu0 %v524
    %795 = vmatpush1.msra.mxu0 %v523
    %796 = vmatprep.subr.mxu0 %v520
    %797 = vmatpush1.msra.mxu0 %v519
    %798 = vmatprep.subr.mxu0 %v516
    %799 = vmatpush1.msra.mxu0 %v515
    %800 = vmatprep.subr.mxu0 %v512
    %801 = vmatpush1.msra.mxu0 %v511
    %802 = vmatprep.subr.mxu0 %v508
    %803 = vmatpush1.msra.mxu0 %v507
    %804 = vmatprep.subr.mxu0 %v504
    %805 = vmatpush1.msra.mxu0 %v503
    %806 = vmatprep.subr.mxu0 0.0
    %807 = vmatpush2.msra.mxu0 0.0
    %808 = vmatprep.subr.mxu0 0.0
    %809 = vmatpush2.msra.mxu0 0.0
    %810 = vmatprep.subr.mxu0 0.0
    %811 = vmatpush2.msra.mxu0 0.0
    %812 = vmatprep.subr.mxu0 0.0
    %813 = vmatpush2.msra.mxu0 0.0
    %814 = vmatprep.subr.mxu0 0.0
    %815 = vmatpush2.msra.mxu0 0.0
    %816 = vmatprep.subr.mxu0 0.0
    %817 = vmatpush2.msra.mxu0 0.0
    %818 = vmatprep.subr.mxu0 0.0
    %819 = vmatpush2.msra.mxu0 0.0
    %820 = vmatprep.subr.mxu0 0.0
    %821 = vmatpush2.msra.mxu0 0.0
    %822 = vmatprep.subr.mxu0 0.0
    %823 = vmatpush2.msra.mxu0 0.0
    %824 = vmatprep.subr.mxu0 0.0
    %825 = vmatpush2.msra.mxu0 0.0
    %826 = vmatprep.subr.mxu0 0.0
    %827 = vmatpush2.msra.mxu0 0.0
    %828 = vmatprep.subr.mxu0 0.0
    %829 = vmatpush2.msra.mxu0 0.0
    %830 = vmatprep.subr.mxu0 0.0
    %831 = vmatpush2.msra.mxu0 0.0
    %832 = vmatprep.subr.mxu0 0.0
    %833 = vmatpush2.msra.mxu0 0.0
    %834 = vmatprep.subr.mxu0 0.0
    %835 = vmatpush2.msra.mxu0 0.0
    %836 = vmatprep.subr.mxu0 0.0
    %837 = vmatpush2.msra.mxu0 0.0
    %838 = vmatprep.mubr.f32.mxu0 0.0
    %839 = vmatmul.mubr.f32.gmra.mxu0 %v502
    %v840 = vpop.f32.mrf.mxu0
    %v841 = vadd.f32 %v699, %v840
    %v842 = vpop.f32.mrf.mxu0
    %v843 = vadd.f32 %v701, %v842
    %844 = vdwg.mxu0
    %845 = vmatprep.subr.mxu0 %v566
    %846 = vmatpush1.msra.mxu0 %v565
    %847 = vmatprep.subr.mxu0 %v562
    %848 = vmatpush1.msra.mxu0 %v561
    %849 = vmatprep.subr.mxu0 %v558
    %850 = vmatpush1.msra.mxu0 %v557
    %851 = vmatprep.subr.mxu0 %v554
    %852 = vmatpush1.msra.mxu0 %v553
    %853 = vmatprep.subr.mxu0 %v550
    %854 = vmatpush1.msra.mxu0 %v549
    %855 = vmatprep.subr.mxu0 %v546
    %856 = vmatpush1.msra.mxu0 %v545
    %857 = vmatprep.subr.mxu0 %v542
    %858 = vmatpush1.msra.mxu0 %v541
    %859 = vmatprep.subr.mxu0 %v538
    %860 = vmatpush1.msra.mxu0 %v537
    %861 = vmatprep.subr.mxu0 %v534
    %862 = vmatpush1.msra.mxu0 %v533
    %863 = vmatprep.subr.mxu0 %v530
    %864 = vmatpush1.msra.mxu0 %v529
    %865 = vmatprep.subr.mxu0 %v526
    %866 = vmatpush1.msra.mxu0 %v525
    %867 = vmatprep.subr.mxu0 %v522
    %868 = vmatpush1.msra.mxu0 %v521
    %869 = vmatprep.subr.mxu0 %v518
    %870 = vmatpush1.msra.mxu0 %v517
    %871 = vmatprep.subr.mxu0 %v514
    %872 = vmatpush1.msra.mxu0 %v513
    %873 = vmatprep.subr.mxu0 %v510
    %874 = vmatpush1.msra.mxu0 %v509
    %875 = vmatprep.subr.mxu0 %v506
    %876 = vmatpush1.msra.mxu0 %v505
    %877 = vmatprep.subr.mxu0 0.0
    %878 = vmatpush2.msra.mxu0 0.0
    %879 = vmatprep.subr.mxu0 0.0
    %880 = vmatpush2.msra.mxu0 0.0
    %881 = vmatprep.subr.mxu0 0.0
    %882 = vmatpush2.msra.mxu0 0.0
    %883 = vmatprep.subr.mxu0 0.0
    %884 = vmatpush2.msra.mxu0 0.0
    %885 = vmatprep.subr.mxu0 0.0
    %886 = vmatpush2.msra.mxu0 0.0
    %887 = vmatprep.subr.mxu0 0.0
    %888 = vmatpush2.msra.mxu0 0.0
    %889 = vmatprep.subr.mxu0 0.0
    %890 = vmatpush2.msra.mxu0 0.0
    %891 = vmatprep.subr.mxu0 0.0
    %892 = vmatpush2.msra.mxu0 0.0
    %893 = vmatprep.subr.mxu0 0.0
    %894 = vmatpush2.msra.mxu0 0.0
    %895 = vmatprep.subr.mxu0 0.0
    %896 = vmatpush2.msra.mxu0 0.0
    %897 = vmatprep.subr.mxu0 0.0
    %898 = vmatpush2.msra.mxu0 0.0
    %899 = vmatprep.subr.mxu0 0.0
    %900 = vmatpush2.msra.mxu0 0.0
    %901 = vmatprep.subr.mxu0 0.0
    %902 = vmatpush2.msra.mxu0 0.0
    %903 = vmatprep.subr.mxu0 0.0
    %904 = vmatpush2.msra.mxu0 0.0
    %905 = vmatprep.subr.mxu0 0.0
    %906 = vmatpush2.msra.mxu0 0.0
    %907 = vmatprep.subr.mxu0 0.0
    %908 = vmatpush2.msra.mxu0 0.0
    %909 = vmatprep.mubr.f32.mxu0 0.0
    %910 = vmatmul.mubr.f32.gmra.mxu0 %v502
    %v911 = vpop.f32.mrf.mxu0
    %v912 = vadd.f32 %v770, %v911
    %v913 = vpop.f32.mrf.mxu0
    %v914 = vadd.f32 %v772, %v913
    %915 = vdwg.mxu0
    %v916 = vld [vmem:[%s5] sm:$0xf]
    %v918 = vlaneseq
    %v919 = vshrl.u32 %v918, 7
    %v920 = vsub.s32 0, %v919
    %v921 = vrot.slane %v916, %v920
    %v922 = vlaneseq
    %v923 = vshrl.u32 %v922, 7
    %v924 = vsub.s32 1, %v923
    %v925 = vrot.slane %v916, %v924
    %v926 = vlaneseq
    %v927 = vshrl.u32 %v926, 7
    %v928 = vsub.s32 2, %v927
    %v929 = vrot.slane %v916, %v928
    %v930 = vlaneseq
    %v931 = vshrl.u32 %v930, 7
    %v932 = vsub.s32 3, %v931
    %v933 = vrot.slane %v916, %v932
    %v938 = vadd.f32 %v841, %v921
    %v939 = vadd.f32 %v843, %v925
    %v940 = vadd.f32 %v912, %v929
    %v941 = vadd.f32 %v914, %v933
    %v942 = vxor.u32 %v938, 2147483648
    %v943 = vmul.f32 %v942, 1.442695
    %v944 = vpow.pop %v943
    %v945 = vadd.f32 %v944, 1.0
    %v946 = vrcp.pop %v945
    %v947 = vmul.f32 1.0, %v946
    %v948 = vxor.u32 %v939, 2147483648
    %v949 = vmul.f32 %v948, 1.442695
    %v950 = vpow.pop %v949
    %v951 = vadd.f32 %v950, 1.0
    %v952 = vrcp.pop %v951
    %v953 = vmul.f32 1.0, %v952
    %v954 = vtanh.pop %v940
    %v955 = vxor.u32 %v941, 2147483648
    %v956 = vmul.f32 %v955, 1.442695
    %v957 = vpow.pop %v956
    %v958 = vadd.f32 %v957, 1.0
    %v959 = vrcp.pop %v958
    %v960 = vmul.f32 1.0, %v959
    %v961 = vld [vmem:[%s7] sm:$0xff]
    %v962 = vmul.f32 %v953, %v961
    %v963 = vmul.f32 %v947, %v954
    %v964 = vadd.f32 %v962, %v963
    %v965 = vtanh.pop %v964
    %v966 = vmul.f32 %v960, %v965
    %967 = vst [vmem:[%s11] sm:$0xff] %v966
    %968 = vst [vmem:[%s12] sm:$0xff] %v964
    %v969 = vld [vmem:[%s8] sm:$0xff]
    %v970 = vld [vmem:[%s8 + $0x8] sm:$0xff]
    %v971 = vld [vmem:[%s8 + $0x10] sm:$0xff]
    %v972 = vld [vmem:[%s8 + $0x18] sm:$0xff]
    %v973 = vld [vmem:[%s8 + $0x20] sm:$0xff]
    %v974 = vld [vmem:[%s8 + $0x28] sm:$0xff]
    %v975 = vld [vmem:[%s8 + $0x30] sm:$0xff]
    %v976 = vld [vmem:[%s8 + $0x38] sm:$0xff]
    %v977 = vld [vmem:[%s8 + $0x40] sm:$0xff]
    %v978 = vld [vmem:[%s8 + $0x48] sm:$0xff]
    %v979 = vld [vmem:[%s8 + $0x50] sm:$0xff]
    %v980 = vld [vmem:[%s8 + $0x58] sm:$0xff]
    %v981 = vld [vmem:[%s8 + $0x60] sm:$0xff]
    %v982 = vld [vmem:[%s8 + $0x68] sm:$0xff]
    %v983 = vld [vmem:[%s8 + $0x70] sm:$0xff]
    %v984 = vld [vmem:[%s8 + $0x78] sm:$0xff]
    %v985 = vld [vmem:[%s9] sm:$0x1]
    %v987 = vlaneseq
    %v988 = vshrl.u32 %v987, 7
    %v989 = vsub.s32 0, %v988
    %v990 = vrot.slane %v985, %v989
    %992 = vmatprep.subr.mxu0 0.0
    %993 = vmatpush1.msra.mxu0 %v984
    %994 = vmatprep.subr.mxu0 0.0
    %995 = vmatpush1.msra.mxu0 %v983
    %996 = vmatprep.subr.mxu0 0.0
    %997 = vmatpush1.msra.mxu0 %v982
    %998 = vmatprep.subr.mxu0 0.0
    %999 = vmatpush1.msra.mxu0 %v981
    %1000 = vmatprep.subr.mxu0 0.0
    %1001 = vmatpush1.msra.mxu0 %v980
    %1002 = vmatprep.subr.mxu0 0.0
    %1003 = vmatpush1.msra.mxu0 %v979
    %1004 = vmatprep.subr.mxu0 0.0
    %1005 = vmatpush1.msra.mxu0 %v978
    %1006 = vmatprep.subr.mxu0 0.0
    %1007 = vmatpush1.msra.mxu0 %v977
    %1008 = vmatprep.subr.mxu0 0.0
    %1009 = vmatpush1.msra.mxu0 %v976
    %1010 = vmatprep.subr.mxu0 0.0
    %1011 = vmatpush1.msra.mxu0 %v975
    %1012 = vmatprep.subr.mxu0 0.0
    %1013 = vmatpush1.msra.mxu0 %v974
    %1014 = vmatprep.subr.mxu0 0.0
    %1015 = vmatpush1.msra.mxu0 %v973
    %1016 = vmatprep.subr.mxu0 0.0
    %1017 = vmatpush1.msra.mxu0 %v972
    %1018 = vmatprep.subr.mxu0 0.0
    %1019 = vmatpush1.msra.mxu0 %v971
    %1020 = vmatprep.subr.mxu0 0.0
    %1021 = vmatpush1.msra.mxu0 %v970
    %1022 = vmatprep.subr.mxu0 0.0
    %1023 = vmatpush1.msra.mxu0 %v969
    %1024 = vmatprep.subr.mxu0 0.0
    %1025 = vmatpush2.msra.mxu0 0.0
    %1026 = vmatprep.subr.mxu0 0.0
    %1027 = vmatpush2.msra.mxu0 0.0
    %1028 = vmatprep.subr.mxu0 0.0
    %1029 = vmatpush2.msra.mxu0 0.0
    %1030 = vmatprep.subr.mxu0 0.0
    %1031 = vmatpush2.msra.mxu0 0.0
    %1032 = vmatprep.subr.mxu0 0.0
    %1033 = vmatpush2.msra.mxu0 0.0
    %1034 = vmatprep.subr.mxu0 0.0
    %1035 = vmatpush2.msra.mxu0 0.0
    %1036 = vmatprep.subr.mxu0 0.0
    %1037 = vmatpush2.msra.mxu0 0.0
    %1038 = vmatprep.subr.mxu0 0.0
    %1039 = vmatpush2.msra.mxu0 0.0
    %1040 = vmatprep.subr.mxu0 0.0
    %1041 = vmatpush2.msra.mxu0 0.0
    %1042 = vmatprep.subr.mxu0 0.0
    %1043 = vmatpush2.msra.mxu0 0.0
    %1044 = vmatprep.subr.mxu0 0.0
    %1045 = vmatpush2.msra.mxu0 0.0
    %1046 = vmatprep.subr.mxu0 0.0
    %1047 = vmatpush2.msra.mxu0 0.0
    %1048 = vmatprep.subr.mxu0 0.0
    %1049 = vmatpush2.msra.mxu0 0.0
    %1050 = vmatprep.subr.mxu0 0.0
    %1051 = vmatpush2.msra.mxu0 0.0
    %1052 = vmatprep.subr.mxu0 0.0
    %1053 = vmatpush2.msra.mxu0 0.0
    %1054 = vmatprep.subr.mxu0 0.0
    %1055 = vmatpush2.msra.mxu0 0.0
    %1056 = vmatprep.mubr.f32.mxu0 0.0
    %1057 = vmatmul.mubr.f32.gmra.mxu0 %v966
    %v1058 = vpop.f32.mrf.mxu0
    %v1059 = vadd.f32 %v990, %v1058
    %v1060 = vpop.f32.mrf.mxu0
    %1061 = vdwg.mxu0
    %1062 = vst [vmem:[%s10] sm:$0xff] %v1059
    // Predicated region
    $region54: #{_lambda_.1} parent=1 // pred_check
      _
    $region55: #{_lambda_.1} parent=1 // pred_check_branch
      %1064 = sbr.rel (0) target = $region57
    $region56: #{_lambda_.1} parent=1 // pred_region
      _
    $region57: #{_lambda_.1} parent=1 // pred_fallthru
      _
    // Predicated region
    $region58: #{_lambda_.1} parent=1 // pred_check
      _
    $region59: #{_lambda_.1} parent=1 // pred_check_branch
      %1066 = sbr.rel (0) target = $region61
    $region60: #{_lambda_.1} parent=1 // pred_region
      _
    $region61: #{_lambda_.1} parent=1 // pred_fallthru
      _
    // Predicated region
    $region62: #{_lambda_.1} parent=1 // pred_check
      _
    $region63: #{_lambda_.1} parent=1 // pred_check_branch
      %1068 = sbr.rel (0) target = $region65
    $region64: #{_lambda_.1} parent=1 // pred_region
      _
    $region65: #{_lambda_.1} parent=1 // pred_fallthru
      _
    // Predicated region
    $region66: #{_lambda_.1} parent=1 // pred_check
      _
    $region67: #{_lambda_.1} parent=1 // pred_check_branch
      %1070 = sbr.rel (0) target = $region69
    $region68: #{_lambda_.1} parent=1 // pred_region
      _
    $region69: #{_lambda_.1} parent=1 // pred_fallthru
      _
    // Predicated region
    $region70: #{_lambda_.1} parent=1 // pred_check
      _
    $region71: #{_lambda_.1} parent=1 // pred_check_branch
      %1072 = sbr.rel (0) target = $region73
    $region72: #{_lambda_.1} parent=1 // pred_region
      _
    $region73: #{_lambda_.1} parent=1 // pred_fallthru
      _
    // Predicated region
    $region74: #{_lambda_.1} parent=1 // pred_check
      _
    $region75: #{_lambda_.1} parent=1 // pred_check_branch
      %1074 = sbr.rel (0) target = $region77
    $region76: #{_lambda_.1} parent=1 // pred_region
      _
    $region77: #{_lambda_.1} parent=1 // pred_fallthru
      _
    %1075 = vsyncpa [#allocation3], 1
    %1076 = vsyncpa [#allocation5], 1

</llo_original>
